<compile_context>
chip_gen: v6e
topology: v6e:2x2x1
jax: 0.10.0
libtpu: 0.0.40
codegen_flags: <defaults>
</compile_context>

<pallas_src>
import jax
import jax.numpy as jnp
from jax.experimental import pallas as pl
from jax.experimental.pallas import tpu as pltpu


def _round_up(n: int, m: int) -> int:
    return ((n + m - 1) // m) * m


def _make_kernel(d_in: int, kh_pad: int):
    """Fused ensemble-mean kernel; d_in / kh_pad are compile-time constants."""

    def kernel(x_ref, w1_ref, w2_ref, o_ref):
        # Static ref slices are free (no copy): recover weights + biases.
        w1 = w1_ref[0:d_in, :]                 # (D_IN, KH_PAD)
        b1 = w1_ref[d_in:d_in + 1, :]          # (1, KH_PAD)
        x = x_ref[...].astype(w1.dtype)        # (TILE_B, D_IN)

        # First layers of all K sub-models in one MXU pass (f32 accumulate).
        h = jnp.dot(x, w1, preferred_element_type=jnp.float32) + b1
        h = jnp.maximum(h, 0.01 * h)           # LeakyReLU(0.01): single vmax

        # Second layers + ensemble mean in one matmul (W2 pre-scaled by 1/K).
        w2 = w2_ref[0:kh_pad, :]               # (KH_PAD, D_OUT_PAD)
        b2 = w2_ref[kh_pad:kh_pad + 1, :]      # (1, D_OUT_PAD) == mean(b2)
        y = jnp.dot(h.astype(w2.dtype), w2,
                    preferred_element_type=jnp.float32) + b2
        o_ref[...] = y.astype(o_ref.dtype)

    return kernel


def build_fused_mean_model(w1, b1, w2, b2, compute_dtype=jnp.float32):
    """Fuse the K sub-model weights ONCE (call per model, reuse per forward).

    w1: (K, D_IN, H)   b1: (K, 1, H)   w2: (K, H, D_OUT)   b2: (K, 1, D_OUT)
    """
    K, D_IN, H = w1.shape
    D_OUT = w2.shape[-1]
    KH = K * H
    KH_PAD = _round_up(KH, 128)                     # lane-width of the hidden
    D_OUT_PAD = _round_up(max(D_OUT, 128), 128)     # lane-dense output

    # First layers concatenated on lanes (k-major, h-minor), b1 as extra row.
    w1_cat = jnp.transpose(w1, (1, 0, 2)).reshape(D_IN, KH)
    b1_cat = b1.reshape(1, KH)
    w1_cmb = jnp.concatenate([w1_cat, b1_cat], axis=0)           # (D_IN+1, KH)
    w1_cmb = jnp.pad(
        w1_cmb,
        ((0, _round_up(D_IN + 1, 8) - (D_IN + 1)), (0, KH_PAD - KH)))

    # Second layers stacked on rows (matching k-major order), pre-scaled by
    # 1/K so the matmul performs the ensemble mean; mean(b2) as extra row.
    w2_stack = w2.reshape(KH, D_OUT) * (1.0 / K)
    w2_stack = jnp.pad(w2_stack, ((0, KH_PAD - KH), (0, 0)))
    b2_mean = jnp.mean(b2, axis=0).reshape(1, D_OUT)
    w2_cmb = jnp.concatenate([w2_stack, b2_mean], axis=0)        # (KH_PAD+1, D_OUT)
    w2_cmb = jnp.pad(
        w2_cmb,
        ((0, _round_up(KH_PAD + 1, 8) - (KH_PAD + 1)), (0, D_OUT_PAD - D_OUT)))

    return dict(
        w1_cmb=jax.device_put(w1_cmb.astype(compute_dtype)),
        w2_cmb=jax.device_put(w2_cmb.astype(compute_dtype)),
        d_in=D_IN, kh_pad=KH_PAD, d_out=D_OUT, d_out_pad=D_OUT_PAD)


def mean_model_forward(x, fused, tile_b: int = 1024):
    """x: (B, D_IN) -> (B, D_OUT) = mean over the K sub-model outputs."""
    B, d_in = x.shape
    assert d_in == fused["d_in"]
    d_out, d_out_pad = fused["d_out"], fused["d_out_pad"]
    kh_pad = fused["kh_pad"]
    w1_cmb, w2_cmb = fused["w1_cmb"], fused["w2_cmb"]

    # Batch tile: multiple of 8 sublanes.  Budgeted against v7x's 64 MiB VMEM
    # (32 MiB default scoped): 2 bufs * tile_b * (d_in + d_out_pad) * 4 B plus
    # ~100 KiB of resident weights stays far under the limit at tile_b<=1024.
    tile_b = min(_round_up(B, 8), _round_up(tile_b, 8))
    b_pad = _round_up(B, tile_b)
    if b_pad != B:
        x = jnp.pad(x, ((0, b_pad - B), (0, 0)))
    grid = (b_pad // tile_b,)

    flops = 2 * b_pad * (d_in * kh_pad + kh_pad * d_out_pad)
    bytes_accessed = (x.size * x.dtype.itemsize
                      + w1_cmb.size * w1_cmb.dtype.itemsize
                      + w2_cmb.size * w2_cmb.dtype.itemsize
                      + b_pad * d_out_pad * x.dtype.itemsize)

    out_pad = pl.pallas_call(
        _make_kernel(d_in, kh_pad),
        out_shape=jax.ShapeDtypeStruct((b_pad, d_out_pad), x.dtype),
        grid_spec=pltpu.PrefetchScalarGridSpec(
            num_scalar_prefetch=0,
            grid=grid,
            in_specs=[
                pl.BlockSpec((tile_b, d_in), lambda i: (i, 0)),   # x row-tiles
                pl.BlockSpec(w1_cmb.shape, lambda i: (0, 0)),     # VMEM-resident
                pl.BlockSpec(w2_cmb.shape, lambda i: (0, 0)),     # VMEM-resident
            ],
            out_specs=pl.BlockSpec((tile_b, d_out_pad), lambda i: (i, 0)),
        ),
        compiler_params=pltpu.CompilerParams(
            dimension_semantics=("parallel",)),
        cost_estimate=pl.CostEstimate(
            flops=flops, transcendentals=0, bytes_accessed=bytes_accessed),
    )(x, w1_cmb, w2_cmb)

    # TODO(synk): if the downstream consumer can take the (B, 128)-padded slab,
    # return out_pad directly and skip this per-call slice copy.
    return out_pad[:B, :d_out]


def mean_model_reference(x, w1, b1, w2, b2):
    """Pure-JAX reference replicating MeanModel.forward over the ensemble."""
    K = w1.shape[0]
    outs = []
    for k in range(K):
        h = x @ w1[k] + b1[k]
        h = jnp.where(h >= 0, h, 0.01 * h)
        outs.append(h @ w2[k] + b2[k])
    return sum(outs) / K


if __name__ == "__main__":
    # Small shapes: batch=8, in-features=32, hidden=32, out-features=16,
    # ensemble of K=4 sub-models (K*H = 128 -> one full MXU contraction tile).
    B, D_IN, H, D_OUT, K = 8, 32, 32, 16, 4

    key = jax.random.PRNGKey(0)
    kx, kw1, kb1, kw2, kb2 = jax.random.split(key, 5)

    x = jax.random.normal(kx, (B, D_IN), dtype=jnp.float32)
    w1 = jax.random.normal(kw1, (K, D_IN, H), dtype=jnp.float32) * 0.1
    b1 = jax.random.normal(kb1, (K, 1, H), dtype=jnp.float32) * 0.1
    w2 = jax.random.normal(kw2, (K, H, D_OUT), dtype=jnp.float32) * 0.1
    b2 = jax.random.normal(kb2, (K, 1, D_OUT), dtype=jnp.float32) * 0.1

    # One-time fusion (hoisted out of the per-call path; f32 for tight check —
    # pass compute_dtype=jnp.bfloat16 on v6e/v7x at production batch sizes).
    fused = build_fused_mean_model(w1, b1, w2, b2, compute_dtype=jnp.float32)

    out = mean_model_forward(x, fused)
    out = jax.block_until_ready(out)

    ref = mean_model_reference(x, w1, b1, w2, b2)
    assert out.shape == (B, D_OUT)
    assert jnp.allclose(out, ref, atol=1e-5, rtol=1e-5)

    print("KERNEL_OK")
</pallas_src>

<mosaic_0001>
module attributes {stable_mosaic.version = 11 : i64} {
  func.func @kernel(%arg0: i32, %arg1: memref<8x32xf32, #tpu.memory_space<vmem>>, %arg2: memref<40x128xf32, #tpu.memory_space<vmem>>, %arg3: memref<136x128xf32, #tpu.memory_space<vmem>>, %arg4: memref<8x128xf32, #tpu.memory_space<vmem>>) attributes {dimension_semantics = [#tpu.dimension_semantics<parallel>], iteration_bounds = array<i64: 1>, scalar_prefetch = 0 : i64, scratch_operands = 0 : i64, tpu.core_type = #tpu.core_type<tc>, window_params = [{transform_indices = @transform_0, window_bounds = array<i64: 8, 32>}, {pipeline_mode = #tpu.pipeline_mode<synchronous>, transform_indices = @transform_1, window_bounds = array<i64: 40, 128>}, {pipeline_mode = #tpu.pipeline_mode<synchronous>, transform_indices = @transform_2, window_bounds = array<i64: 136, 128>}, {transform_indices = @transform_3, window_bounds = array<i64: 8, 128>}]} {
    %c0 = arith.constant 0 : index
    %c0_0 = arith.constant 0 : index
    %0 = vector.load %arg2[%c0, %c0_0] : memref<40x128xf32, #tpu.memory_space<vmem>>, vector<32x128xf32>
    %c32 = arith.constant 32 : index
    %c0_1 = arith.constant 0 : index
    %1 = vector.load %arg2[%c32, %c0_1] : memref<40x128xf32, #tpu.memory_space<vmem>>, vector<1x128xf32>
    %c0_2 = arith.constant 0 : index
    %c0_3 = arith.constant 0 : index
    %2 = vector.load %arg1[%c0_2, %c0_3] : memref<8x32xf32, #tpu.memory_space<vmem>>, vector<8x32xf32>
    %cst = arith.constant dense<0.000000e+00> : vector<8x128xf32>
    %3 = tpu.matmul %2, %0, %cst {dimension_numbers = #tpu.dot_dimension_numbers<[1], [0], [0], [1], [0, 0, 1, 1], [], []>} : vector<8x32xf32>, vector<32x128xf32>, vector<8x128xf32> -> vector<8x128xf32>
    %4 = vector.broadcast %1 : vector<1x128xf32> to vector<8x128xf32>
    %5 = arith.addf %3, %4 : vector<8x128xf32>
    %cst_4 = arith.constant 0.00999999977 : f32
    %6 = vector.broadcast %cst_4 : f32 to vector<8x128xf32>
    %7 = arith.mulf %6, %5 : vector<8x128xf32>
    %8 = arith.maximumf %5, %7 : vector<8x128xf32>
    %c0_5 = arith.constant 0 : index
    %c0_6 = arith.constant 0 : index
    %9 = vector.load %arg3[%c0_5, %c0_6] : memref<136x128xf32, #tpu.memory_space<vmem>>, vector<128x128xf32>
    %c128 = arith.constant 128 : index
    %c0_7 = arith.constant 0 : index
    %10 = vector.load %arg3[%c128, %c0_7] : memref<136x128xf32, #tpu.memory_space<vmem>>, vector<1x128xf32>
    %cst_8 = arith.constant dense<0.000000e+00> : vector<8x128xf32>
    %11 = tpu.matmul %8, %9, %cst_8 {dimension_numbers = #tpu.dot_dimension_numbers<[1], [0], [0], [1], [0, 0, 1, 1], [], []>} : vector<8x128xf32>, vector<128x128xf32>, vector<8x128xf32> -> vector<8x128xf32>
    %12 = vector.broadcast %10 : vector<1x128xf32> to vector<8x128xf32>
    %13 = arith.addf %11, %12 : vector<8x128xf32>
    %c0_9 = arith.constant 0 : index
    %c0_10 = arith.constant 0 : index
    %14 = vector.load %arg4[%c0_9, %c0_10] : memref<8x128xf32, #tpu.memory_space<vmem>>, vector<8x128xf32>
    tpu.vector_store %arg4[%c0_9, %c0_10], %13 {strides = array<i32>} : memref<8x128xf32, #tpu.memory_space<vmem>>, vector<8x128xf32>,
    return
  }
  func.func @transform_0(%arg0: i32) -> (i32, i32) {
    %c0_i32 = arith.constant 0 : i32
    %c0_i32_0 = arith.constant 0 : i32
    return %arg0, %c0_i32 : i32, i32
  }
  func.func @transform_1(%arg0: i32) -> (i32, i32) {
    %c0_i32 = arith.constant 0 : i32
    %c0_i32_0 = arith.constant 0 : i32
    %c0_i32_1 = arith.constant 0 : i32
    return %c0_i32, %c0_i32_0 : i32, i32
  }
  func.func @transform_2(%arg0: i32) -> (i32, i32) {
    %c0_i32 = arith.constant 0 : i32
    %c0_i32_0 = arith.constant 0 : i32
    %c0_i32_1 = arith.constant 0 : i32
    return %c0_i32, %c0_i32_0 : i32, i32
  }
  func.func @transform_3(%arg0: i32) -> (i32, i32) {
    %c0_i32 = arith.constant 0 : i32
    %c0_i32_0 = arith.constant 0 : i32
    return %arg0, %c0_i32 : i32, i32
  }
}

</mosaic_0001>

<llo_original>
// kernel: tpu_custom_call.1
$region0: #{tpu_custom_call.1}
  #allocation0 [shape = 'u32[]', space=smem, size = 0x4, offset = 0x4, fixed_abs, tag = 'smem constant byte address 0x4 - core index']
  #allocation1 [shape = 'u32[144,128]{1,0:T(1,128)}', space=vmem, size = 0x12000, scoped, tag = 'internal scratch']
  %s0 = inlined_call_operand.hbm [shape: f32[8,32], index: 0, kind: input, shape index: {}]
  %s1 = inlined_call_operand.hbm [shape: f32[40,128], index: 1, kind: input, shape index: {}]
  %s2 = inlined_call_operand.hbm [shape: f32[136,128], index: 2, kind: input, shape index: {}]
  %s3 = inlined_call_operand.hbm [shape: f32[8,128], index: 3, kind: output, shape index: {}]
  %s4 = sld [smem:[#allocation0]]
  $region34: #{tpu_custom_call.1} parent=0
    _
  %s6 = ssub.s32 1, %s4
  %s7 = scalar_select 0, %s6, %s4
  $region1: #{tpu_custom_call.1} parent=0
    #allocation2 [shape = 'u8[4096]{0}', space=vmem, size = 0x1000, scoped, tag = 'input window, operand 0, single buffered']
    #allocation3 [shape = 's32[1]{0}', space=sflag, size = 0x4, scoped, tag = 'scoped memory for tpu_custom_call.1']
    #allocation4 [shape = 's32[1]{0}', space=sflag, size = 0x4, scoped, tag = 'scoped memory for tpu_custom_call.1']
    #allocation5 [shape = 'u8[20480]{0}', space=vmem, size = 0x5000, scoped, tag = 'input window, operand 1, single buffered']
    #allocation6 [shape = 's32[1]{0}', space=sflag, size = 0x4, scoped, tag = 'scoped memory for tpu_custom_call.1']
    #allocation7 [shape = 'u8[69632]{0}', space=vmem, size = 0x11000, scoped, tag = 'input window, operand 2, single buffered']
    #allocation8 [shape = 'u8[4096]{0}', space=vmem, size = 0x1000, scoped, tag = 'output window, operand 0, single buffered']
    %8 = vsyncpa [#allocation3], 0
    %9 = vsyncpa [#allocation6], 0
    %10 = vsyncpa [#allocation4], 0
    // Predicated region
    $region2: #{tpu_custom_call.1} parent=1 // pred_check
      _
    $region3: #{tpu_custom_call.1} parent=1 // pred_check_branch
      %12 = sbr.rel (0) target = $region5
    $region4: #{tpu_custom_call.1} parent=1 // pred_region
      %s14 = ssub.s32 128, 128
      %15 = vsyncadd [#allocation3], %s14
      %s17 = sshll.u32 [#allocation2], 4
      %s18 = int_to_ptr.vmem [resolvable:$true] %s17
      %20 = dma.hbm_to_vmem [thread:$0]  %s0, 128, %s18, [#allocation3]
    $region5: #{tpu_custom_call.1} parent=1 // pred_fallthru
      _
    // Predicated region
    $region6: #{tpu_custom_call.1} parent=1 // pred_check
      _
    $region7: #{tpu_custom_call.1} parent=1 // pred_check_branch
      %22 = sbr.rel (0) target = $region9
    $region8: #{tpu_custom_call.1} parent=1 // pred_region
      %s24 = ssub.s32 640, 640
      %25 = vsyncadd [#allocation6], %s24
      %s26 = sshll.u32 [#allocation5], 4
      %s27 = int_to_ptr.vmem [resolvable:$true] %s26
      %32 = dma.hbm_to_vmem [thread:$0]  %s1, 640, %s27, [#allocation6], 128, 128, 8
    $region9: #{tpu_custom_call.1} parent=1 // pred_fallthru
      _
    // Predicated region
    $region10: #{tpu_custom_call.1} parent=1 // pred_check
      _
    $region11: #{tpu_custom_call.1} parent=1 // pred_check_branch
      %34 = sbr.rel (0) target = $region13
    $region12: #{tpu_custom_call.1} parent=1 // pred_region
      %s36 = ssub.s32 2176, 2176
      %37 = vsyncadd [#allocation6], %s36
      %s38 = sshll.u32 [#allocation7], 4
      %s39 = int_to_ptr.vmem [resolvable:$true] %s38
      %44 = dma.hbm_to_vmem [thread:$0]  %s2, 2176, %s39, [#allocation6], 128, 128, 8
    $region13: #{tpu_custom_call.1} parent=1 // pred_fallthru
      _
    // Predicated region
    $region14: #{tpu_custom_call.1} parent=1 // pred_check
      _
    $region15: #{tpu_custom_call.1} parent=1 // pred_check_branch
      %46 = sbr.rel (0) target = $region17
    $region16: #{tpu_custom_call.1} parent=1 // pred_region
      %47 = dma.done [#allocation3], 128
    $region17: #{tpu_custom_call.1} parent=1 // pred_fallthru
      _
    // Predicated region
    $region18: #{tpu_custom_call.1} parent=1 // pred_check
      _
    $region19: #{tpu_custom_call.1} parent=1 // pred_check_branch
      %49 = sbr.rel (0) target = $region21
    $region20: #{tpu_custom_call.1} parent=1 // pred_region
      %50 = dma.done [#allocation6], 640
    $region21: #{tpu_custom_call.1} parent=1 // pred_fallthru
      _
    // Predicated region
    $region22: #{tpu_custom_call.1} parent=1 // pred_check
      _
    $region23: #{tpu_custom_call.1} parent=1 // pred_check_branch
      %52 = sbr.rel (0) target = $region25
    $region24: #{tpu_custom_call.1} parent=1 // pred_region
      %53 = dma.done [#allocation6], 2176
    $region25: #{tpu_custom_call.1} parent=1 // pred_fallthru
      _
    %v54 = vld [vmem:[#allocation5] sm:$0xff]
    %v55 = vld [vmem:[#allocation5 + $0x8] sm:$0xff]
    %v56 = vld [vmem:[#allocation5 + $0x10] sm:$0xff]
    %v57 = vld [vmem:[#allocation5 + $0x18] sm:$0xff]
    %v58 = vld [vmem:[#allocation5 + $0x20] sm:$0x1]
    %v59 = vld [vmem:[#allocation2] sm:$0xff]
    %v60 = vlaneseq
    %v61 = vshrl.u32 %v60, 7
    %v62 = vsub.s32 0, %v61
    %v63 = vrot.slane %v58, %v62
    %vm64 = vcmask 261120
    %v66 = vsel %vm64, %v59, 0
    %68 = vmatprep.subr.mxu0 0.0
    %69 = vmatpush1.msra.mxu0 0.0
    %70 = vmatprep.subr.mxu0 0.0
    %71 = vmatpush1.msra.mxu0 0.0
    %72 = vmatprep.subr.mxu0 0.0
    %73 = vmatpush1.msra.mxu0 0.0
    %74 = vmatprep.subr.mxu0 0.0
    %75 = vmatpush1.msra.mxu0 0.0
    %76 = vmatprep.subr.mxu0 0.0
    %77 = vmatpush1.msra.mxu0 0.0
    %78 = vmatprep.subr.mxu0 0.0
    %79 = vmatpush1.msra.mxu0 0.0
    %80 = vmatprep.subr.mxu0 0.0
    %81 = vmatpush1.msra.mxu0 0.0
    %82 = vmatprep.subr.mxu0 0.0
    %83 = vmatpush1.msra.mxu0 0.0
    %84 = vmatprep.subr.mxu0 0.0
    %85 = vmatpush1.msra.mxu0 0.0
    %86 = vmatprep.subr.mxu0 0.0
    %87 = vmatpush1.msra.mxu0 0.0
    %88 = vmatprep.subr.mxu0 0.0
    %89 = vmatpush1.msra.mxu0 0.0
    %90 = vmatprep.subr.mxu0 0.0
    %91 = vmatpush1.msra.mxu0 0.0
    %92 = vmatprep.subr.mxu0 0.0
    %93 = vmatpush1.msra.mxu0 %v57
    %94 = vmatprep.subr.mxu0 0.0
    %95 = vmatpush1.msra.mxu0 %v56
    %96 = vmatprep.subr.mxu0 0.0
    %97 = vmatpush1.msra.mxu0 %v55
    %98 = vmatprep.subr.mxu0 0.0
    %99 = vmatpush1.msra.mxu0 %v54
    %100 = vmatprep.subr.mxu0 0.0
    %101 = vmatpush2.msra.mxu0 0.0
    %102 = vmatprep.subr.mxu0 0.0
    %103 = vmatpush2.msra.mxu0 0.0
    %104 = vmatprep.subr.mxu0 0.0
    %105 = vmatpush2.msra.mxu0 0.0
    %106 = vmatprep.subr.mxu0 0.0
    %107 = vmatpush2.msra.mxu0 0.0
    %108 = vmatprep.subr.mxu0 0.0
    %109 = vmatpush2.msra.mxu0 0.0
    %110 = vmatprep.subr.mxu0 0.0
    %111 = vmatpush2.msra.mxu0 0.0
    %112 = vmatprep.subr.mxu0 0.0
    %113 = vmatpush2.msra.mxu0 0.0
    %114 = vmatprep.subr.mxu0 0.0
    %115 = vmatpush2.msra.mxu0 0.0
    %116 = vmatprep.subr.mxu0 0.0
    %117 = vmatpush2.msra.mxu0 0.0
    %118 = vmatprep.subr.mxu0 0.0
    %119 = vmatpush2.msra.mxu0 0.0
    %120 = vmatprep.subr.mxu0 0.0
    %121 = vmatpush2.msra.mxu0 0.0
    %122 = vmatprep.subr.mxu0 0.0
    %123 = vmatpush2.msra.mxu0 0.0
    %124 = vmatprep.subr.mxu0 0.0
    %125 = vmatpush2.msra.mxu0 0.0
    %126 = vmatprep.subr.mxu0 0.0
    %127 = vmatpush2.msra.mxu0 0.0
    %128 = vmatprep.subr.mxu0 0.0
    %129 = vmatpush2.msra.mxu0 0.0
    %130 = vmatprep.subr.mxu0 0.0
    %131 = vmatpush2.msra.mxu0 0.0
    %132 = vmatprep.mubr.f32.mxu0 0.0
    %133 = vmatmul.mubr.f32.gmra.mxu0 %v66
    %v134 = vpop.f32.mrf.mxu0
    %v135 = vadd.f32 %v63, %v134
    %v136 = vpop.f32.mrf.mxu0
    %137 = vdwg.mxu0
    %v138 = vmul.f32 %v135, 0.01
    %v139 = vmax.f32 %v135, %v138
    %v140 = vld [vmem:[#allocation7] sm:$0xff]
    %v141 = vld [vmem:[#allocation7 + $0x8] sm:$0xff]
    %v142 = vld [vmem:[#allocation7 + $0x10] sm:$0xff]
    %v143 = vld [vmem:[#allocation7 + $0x18] sm:$0xff]
    %v144 = vld [vmem:[#allocation7 + $0x20] sm:$0xff]
    %v145 = vld [vmem:[#allocation7 + $0x28] sm:$0xff]
    %v146 = vld [vmem:[#allocation7 + $0x30] sm:$0xff]
    %v147 = vld [vmem:[#allocation7 + $0x38] sm:$0xff]
    %v148 = vld [vmem:[#allocation7 + $0x40] sm:$0xff]
    %v149 = vld [vmem:[#allocation7 + $0x48] sm:$0xff]
    %v150 = vld [vmem:[#allocation7 + $0x50] sm:$0xff]
    %v151 = vld [vmem:[#allocation7 + $0x58] sm:$0xff]
    %v152 = vld [vmem:[#allocation7 + $0x60] sm:$0xff]
    %v153 = vld [vmem:[#allocation7 + $0x68] sm:$0xff]
    %v154 = vld [vmem:[#allocation7 + $0x70] sm:$0xff]
    %v155 = vld [vmem:[#allocation7 + $0x78] sm:$0xff]
    %v156 = vld [vmem:[#allocation7 + $0x80] sm:$0x1]
    %v157 = vlaneseq
    %v158 = vshrl.u32 %v157, 7
    %v159 = vsub.s32 0, %v158
    %v160 = vrot.slane %v156, %v159
    %161 = vmatprep.subr.mxu0 0.0
    %162 = vmatpush1.msra.mxu0 %v155
    %163 = vmatprep.subr.mxu0 0.0
    %164 = vmatpush1.msra.mxu0 %v154
    %165 = vmatprep.subr.mxu0 0.0
    %166 = vmatpush1.msra.mxu0 %v153
    %167 = vmatprep.subr.mxu0 0.0
    %168 = vmatpush1.msra.mxu0 %v152
    %169 = vmatprep.subr.mxu0 0.0
    %170 = vmatpush1.msra.mxu0 %v151
    %171 = vmatprep.subr.mxu0 0.0
    %172 = vmatpush1.msra.mxu0 %v150
    %173 = vmatprep.subr.mxu0 0.0
    %174 = vmatpush1.msra.mxu0 %v149
    %175 = vmatprep.subr.mxu0 0.0
    %176 = vmatpush1.msra.mxu0 %v148
    %177 = vmatprep.subr.mxu0 0.0
    %178 = vmatpush1.msra.mxu0 %v147
    %179 = vmatprep.subr.mxu0 0.0
    %180 = vmatpush1.msra.mxu0 %v146
    %181 = vmatprep.subr.mxu0 0.0
    %182 = vmatpush1.msra.mxu0 %v145
    %183 = vmatprep.subr.mxu0 0.0
    %184 = vmatpush1.msra.mxu0 %v144
    %185 = vmatprep.subr.mxu0 0.0
    %186 = vmatpush1.msra.mxu0 %v143
    %187 = vmatprep.subr.mxu0 0.0
    %188 = vmatpush1.msra.mxu0 %v142
    %189 = vmatprep.subr.mxu0 0.0
    %190 = vmatpush1.msra.mxu0 %v141
    %191 = vmatprep.subr.mxu0 0.0
    %192 = vmatpush1.msra.mxu0 %v140
    %193 = vmatprep.subr.mxu0 0.0
    %194 = vmatpush2.msra.mxu0 0.0
    %195 = vmatprep.subr.mxu0 0.0
    %196 = vmatpush2.msra.mxu0 0.0
    %197 = vmatprep.subr.mxu0 0.0
    %198 = vmatpush2.msra.mxu0 0.0
    %199 = vmatprep.subr.mxu0 0.0
    %200 = vmatpush2.msra.mxu0 0.0
    %201 = vmatprep.subr.mxu0 0.0
    %202 = vmatpush2.msra.mxu0 0.0
    %203 = vmatprep.subr.mxu0 0.0
    %204 = vmatpush2.msra.mxu0 0.0
    %205 = vmatprep.subr.mxu0 0.0
    %206 = vmatpush2.msra.mxu0 0.0
    %207 = vmatprep.subr.mxu0 0.0
    %208 = vmatpush2.msra.mxu0 0.0
    %209 = vmatprep.subr.mxu0 0.0
    %210 = vmatpush2.msra.mxu0 0.0
    %211 = vmatprep.subr.mxu0 0.0
    %212 = vmatpush2.msra.mxu0 0.0
    %213 = vmatprep.subr.mxu0 0.0
    %214 = vmatpush2.msra.mxu0 0.0
    %215 = vmatprep.subr.mxu0 0.0
    %216 = vmatpush2.msra.mxu0 0.0
    %217 = vmatprep.subr.mxu0 0.0
    %218 = vmatpush2.msra.mxu0 0.0
    %219 = vmatprep.subr.mxu0 0.0
    %220 = vmatpush2.msra.mxu0 0.0
    %221 = vmatprep.subr.mxu0 0.0
    %222 = vmatpush2.msra.mxu0 0.0
    %223 = vmatprep.subr.mxu0 0.0
    %224 = vmatpush2.msra.mxu0 0.0
    %225 = vmatprep.mubr.f32.mxu0 0.0
    %226 = vmatmul.mubr.f32.gmra.mxu0 %v139
    %v227 = vpop.f32.mrf.mxu0
    %v228 = vadd.f32 %v160, %v227
    %v229 = vpop.f32.mrf.mxu0
    %230 = vdwg.mxu0
    %231 = vst [vmem:[#allocation8] sm:$0xff] %v228
    // Predicated region
    $region26: #{tpu_custom_call.1} parent=1 // pred_check
      _
    $region27: #{tpu_custom_call.1} parent=1 // pred_check_branch
      %233 = sbr.rel (0) target = $region29
    $region28: #{tpu_custom_call.1} parent=1 // pred_region
      %s235 = ssub.s32 128, 128
      %236 = vsyncadd [#allocation4], %s235
      %s238 = sshll.u32 [#allocation8], 4
      %s239 = int_to_ptr.vmem [resolvable:$true] %s238
      %241 = dma.vmem_to_hbm [thread:$0]  %s239, 128, %s3, [#allocation4]
    $region29: #{tpu_custom_call.1} parent=1 // pred_fallthru
      _
    // Predicated region
    $region30: #{tpu_custom_call.1} parent=1 // pred_check
      _
    $region31: #{tpu_custom_call.1} parent=1 // pred_check_branch
      %243 = sbr.rel (0) target = $region33
    $region32: #{tpu_custom_call.1} parent=1 // pred_region
      %244 = dma.done [#allocation4], 128
    $region33: #{tpu_custom_call.1} parent=1 // pred_fallthru
      _
    %245 = vsyncpa [#allocation3], 1
    %246 = vsyncpa [#allocation6], 1
    %247 = vsyncpa [#allocation4], 1

</llo_original>
